<compile_context>
chip_gen: v7x
topology: tpu7x:2x2x1
jax: 0.10.0
libtpu: 0.0.40
codegen_flags: <defaults>
</compile_context>

<pallas_src>
import jax
import jax.numpy as jnp
from jax import lax
from jax.experimental import pallas as pl
from jax.experimental.pallas import tpu as pltpu


def _round_up(x, m):
    return ((x + m - 1) // m) * m


def _stage2_kernel(x_ref, w1t_ref, b1_ref, w2_ref, b2_ref, o_ref):
    # x_ref  : (TB, D)   batch tile, features on lanes
    # w1t_ref: (Hp, D)   fc1 weight (PyTorch [hidden, in] layout), VMEM-resident
    # b1_ref : (Hp, 1)   fc1 bias as a column
    # w2_ref : (Hp, 1)   fc2 weight as a column
    # b2_ref : (1, 1)    fc2 bias
    # o_ref  : (1, TB)   lane-dense output row (batch on the lane axis)

    # fc1 in transposed orientation: hT[h, t] = sum_d W1[h, d] * x[t, d]
    # (contract the last dim of both operands -- the q @ k^T pattern), f32 MXU accum.
    h_t = lax.dot_general(
        w1t_ref[...], x_ref[...],
        dimension_numbers=(((1,), (1,)), ((), ())),
        preferred_element_type=jnp.float32,
    )                                                   # (Hp, TB)

    # bias + ReLU (VPU); b1 broadcasts across lanes.
    h_t = jnp.maximum(h_t + b1_ref[...], 0.0)

    # dropout1: identity in eval mode (no masking, no scaling).

    # fc2 (out_features == 1): VPU multiply + sublane reduction instead of a wasted
    # MXU pass with a single output column.  Result is already lane-dense (1, TB).
    out = jnp.sum(h_t * w2_ref[...], axis=0, keepdims=True) + b2_ref[...]
    o_ref[...] = out.astype(o_ref.dtype)


def stage2_regressor_forward(x, w1, b1, w2, b2, *, block_b=512):
    """Forward pass of Stage2Regressor.

    x : [B, D] activations.
    w1: [D, H]  (fc1.weight transposed), b1: [H]
    w2: [H, 1]  (fc2.weight transposed), b2: [1]
    Returns [B, 1].
    """
    B, D = x.shape
    H = w1.shape[1]

    # Hidden dim lives on the sublane axis in-kernel -> pad to a multiple of 8 with
    # zeros (exact results; padded rows contribute 0 after the w2 multiply).
    Hp = _round_up(H, 8)
    w1t = jnp.swapaxes(w1, 0, 1)                      # (H, D) -- PyTorch fc1.weight layout
    if Hp != H:
        w1t = jnp.pad(w1t, ((0, Hp - H), (0, 0)))
        b1 = jnp.pad(b1, (0, Hp - H))
        w2 = jnp.pad(w2, ((0, Hp - H), (0, 0)))
    b1c = b1.reshape(Hp, 1)
    w2c = w2.reshape(Hp, 1)
    b2c = b2.reshape(1, 1)

    # Batch tile: multiple of 8 sublanes; >=128 keeps the output stores unmasked.
    tb = min(block_b, _round_up(B, 8))
    tb = _round_up(tb, 8)
    num_tiles = pl.cdiv(B, tb)
    b_pad = num_tiles * tb
    if b_pad != B:
        x = jnp.pad(x, ((0, b_pad - B), (0, 0)))      # padded rows are sliced off below

    out = pl.pallas_call(
        _stage2_kernel,
        out_shape=jax.ShapeDtypeStruct((num_tiles, tb), x.dtype),
        grid=(num_tiles,),
        in_specs=[
            pl.BlockSpec((tb, D), lambda i: (i, 0)),   # x: one batch tile per step
            pl.BlockSpec((Hp, D), lambda i: (0, 0)),   # weights/biases: VMEM-resident
            pl.BlockSpec((Hp, 1), lambda i: (0, 0)),
            pl.BlockSpec((Hp, 1), lambda i: (0, 0)),
            pl.BlockSpec((1, 1), lambda i: (0, 0)),
        ],
        out_specs=pl.BlockSpec((1, tb), lambda i: (i, 0)),   # lane-dense per-tile row
        compiler_params=pltpu.CompilerParams(
            dimension_semantics=("parallel",),          # independent batch tiles
        ),
    )(x, w1t, b1c, w2c, b2c)

    # Layout plumbing back to [B, 1]; (num_tiles, tb) flattens in padded-batch order.
    return out.reshape(-1)[:B].reshape(B, 1)


def _ref_forward(x, w1, b1, w2, b2):
    h = jnp.maximum(x @ w1 + b1, 0.0)
    return h @ w2 + b2


if __name__ == "__main__":
    # Shapes consistent with the module: input_size=32, hidden_size=64, output=1.
    D, H = 32, 64
    key = jax.random.PRNGKey(0)
    kx, kw1, kb1, kw2, kb2, kx2 = jax.random.split(key, 6)

    # nn.Linear param shapes: fc1.weight [H, D], fc1.bias [H]; fc2.weight [1, H],
    # fc2.bias [1].  Stored here pre-transposed: w1 [D, H], w2 [H, 1].
    w1 = jax.random.normal(kw1, (D, H), dtype=jnp.float32) * 0.1
    b1 = jax.random.normal(kb1, (H,), dtype=jnp.float32) * 0.1
    w2 = jax.random.normal(kw2, (H, 1), dtype=jnp.float32) * 0.1
    b2 = jax.random.normal(kb2, (1,), dtype=jnp.float32) * 0.1

    # Small batch (single tile, overhead-bound regime).
    B = 8
    x = jax.random.normal(kx, (B, D), dtype=jnp.float32)
    out = jax.block_until_ready(stage2_regressor_forward(x, w1, b1, w2, b2))
    ref = _ref_forward(x, w1, b1, w2, b2)
    assert out.shape == (B, 1), out.shape
    assert jnp.allclose(out, ref, atol=1e-4, rtol=1e-5), "mismatch vs reference (B=8)"

    # Larger batch exercising the tiled grid + remainder padding path.
    B2 = 300
    x2 = jax.random.normal(kx2, (B2, D), dtype=jnp.float32)
    out2 = jax.block_until_ready(
        stage2_regressor_forward(x2, w1, b1, w2, b2, block_b=128))
    ref2 = _ref_forward(x2, w1, b1, w2, b2)
    assert out2.shape == (B2, 1), out2.shape
    assert jnp.allclose(out2, ref2, atol=1e-4, rtol=1e-5), "mismatch vs reference (B=300)"

    print("KERNEL_OK")
</pallas_src>

<mosaic_0001>
module attributes {stable_mosaic.version = 11 : i64} {
  func.func @_stage2_kernel(%arg0: i32, %arg1: memref<8x32xf32, #tpu.memory_space<vmem>>, %arg2: memref<64x32xf32, #tpu.memory_space<vmem>>, %arg3: memref<64x1xf32, #tpu.memory_space<vmem>>, %arg4: memref<64x1xf32, #tpu.memory_space<vmem>>, %arg5: memref<1x1xf32, #tpu.memory_space<vmem>>, %arg6: memref<1x8xf32, #tpu.memory_space<vmem>>) attributes {dimension_semantics = [#tpu.dimension_semantics<parallel>], iteration_bounds = array<i64: 1>, scalar_prefetch = 0 : i64, scratch_operands = 0 : i64, tpu.core_type = #tpu.core_type<tc>, window_params = [{transform_indices = @transform_0, window_bounds = array<i64: 8, 32>}, {pipeline_mode = #tpu.pipeline_mode<synchronous>, transform_indices = @transform_1, window_bounds = array<i64: 64, 32>}, {pipeline_mode = #tpu.pipeline_mode<synchronous>, transform_indices = @transform_2, window_bounds = array<i64: 64, 1>}, {pipeline_mode = #tpu.pipeline_mode<synchronous>, transform_indices = @transform_3, window_bounds = array<i64: 64, 1>}, {pipeline_mode = #tpu.pipeline_mode<synchronous>, transform_indices = @transform_4, window_bounds = array<i64: 1, 1>}, {transform_indices = @transform_5, window_bounds = array<i64: 1, 8>}]} {
    %c0 = arith.constant 0 : index
    %c0_0 = arith.constant 0 : index
    %0 = vector.load %arg2[%c0, %c0_0] : memref<64x32xf32, #tpu.memory_space<vmem>>, vector<64x32xf32>
    %c0_1 = arith.constant 0 : index
    %c0_2 = arith.constant 0 : index
    %1 = vector.load %arg1[%c0_1, %c0_2] : memref<8x32xf32, #tpu.memory_space<vmem>>, vector<8x32xf32>
    %cst = arith.constant dense<0.000000e+00> : vector<64x8xf32>
    %2 = tpu.matmul %0, %1, %cst {dimension_numbers = #tpu.dot_dimension_numbers<[1], [1], [0], [0], [0, 0, 1, 0], [], []>} : vector<64x32xf32>, vector<8x32xf32>, vector<64x8xf32> -> vector<64x8xf32>
    %c0_3 = arith.constant 0 : index
    %c0_4 = arith.constant 0 : index
    %3 = vector.load %arg3[%c0_3, %c0_4] : memref<64x1xf32, #tpu.memory_space<vmem>>, vector<64x1xf32>
    %4 = vector.broadcast %3 : vector<64x1xf32> to vector<64x8xf32>
    %5 = arith.addf %2, %4 : vector<64x8xf32>
    %cst_5 = arith.constant 0.000000e+00 : f32
    %6 = vector.broadcast %cst_5 : f32 to vector<64x8xf32>
    %7 = arith.maximumf %5, %6 : vector<64x8xf32>
    %c0_6 = arith.constant 0 : index
    %c0_7 = arith.constant 0 : index
    %8 = vector.load %arg4[%c0_6, %c0_7] : memref<64x1xf32, #tpu.memory_space<vmem>>, vector<64x1xf32>
    %9 = vector.broadcast %8 : vector<64x1xf32> to vector<64x8xf32>
    %10 = arith.mulf %7, %9 : vector<64x8xf32>
    %cst_8 = arith.constant dense<0.000000e+00> : vector<8xf32>
    %11 = vector.multi_reduction <add>, %10, %cst_8 [0] : vector<64x8xf32> to vector<8xf32>
    %12 = vector.shape_cast %11 : vector<8xf32> to vector<1x8xf32>
    %c0_9 = arith.constant 0 : index
    %c0_10 = arith.constant 0 : index
    %13 = vector.load %arg5[%c0_9, %c0_10] : memref<1x1xf32, #tpu.memory_space<vmem>>, vector<1x1xf32>
    %14 = vector.broadcast %13 : vector<1x1xf32> to vector<1x8xf32>
    %15 = arith.addf %12, %14 : vector<1x8xf32>
    %c0_11 = arith.constant 0 : index
    %c0_12 = arith.constant 0 : index
    %16 = vector.load %arg6[%c0_11, %c0_12] : memref<1x8xf32, #tpu.memory_space<vmem>>, vector<1x8xf32>
    tpu.vector_store %arg6[%c0_11, %c0_12], %15 {strides = array<i32>} : memref<1x8xf32, #tpu.memory_space<vmem>>, vector<1x8xf32>,
    return
  }
  func.func @transform_0(%arg0: i32) -> (i32, i32) {
    %c0_i32 = arith.constant 0 : i32
    %c0_i32_0 = arith.constant 0 : i32
    return %arg0, %c0_i32 : i32, i32
  }
  func.func @transform_1(%arg0: i32) -> (i32, i32) {
    %c0_i32 = arith.constant 0 : i32
    %c0_i32_0 = arith.constant 0 : i32
    %c0_i32_1 = arith.constant 0 : i32
    return %c0_i32, %c0_i32_0 : i32, i32
  }
  func.func @transform_2(%arg0: i32) -> (i32, i32) {
    %c0_i32 = arith.constant 0 : i32
    %c0_i32_0 = arith.constant 0 : i32
    %c0_i32_1 = arith.constant 0 : i32
    return %c0_i32, %c0_i32_0 : i32, i32
  }
  func.func @transform_3(%arg0: i32) -> (i32, i32) {
    %c0_i32 = arith.constant 0 : i32
    %c0_i32_0 = arith.constant 0 : i32
    %c0_i32_1 = arith.constant 0 : i32
    return %c0_i32, %c0_i32_0 : i32, i32
  }
  func.func @transform_4(%arg0: i32) -> (i32, i32) {
    %c0_i32 = arith.constant 0 : i32
    %c0_i32_0 = arith.constant 0 : i32
    %c0_i32_1 = arith.constant 0 : i32
    return %c0_i32, %c0_i32_0 : i32, i32
  }
  func.func @transform_5(%arg0: i32) -> (i32, i32) {
    %c0_i32 = arith.constant 0 : i32
    %c0_i32_0 = arith.constant 0 : i32
    return %arg0, %c0_i32 : i32, i32
  }
}

</mosaic_0001>

<llo_original>
// kernel: tpu_custom_call.1
$region0: #{tpu_custom_call.1}
  #allocation0 [shape = 'u32[]', space=smem, size = 0x4, offset = 0x4, fixed_abs, tag = 'smem constant byte address 0x4 - core index']
  #allocation1 [shape = 'u32[144,128]{1,0:T(1,128)}', space=vmem, size = 0x12000, scoped, tag = 'internal scratch']
  #allocation2 [shape = 'f32[1,1]{1,0:T(1,128)S(1)}', space=vmem, size = 0x200, scoped, tag = 'scoped memory for tpu_custom_call.1']
  %s0 = inlined_call_operand.vmem [shape: f32[8,32], index: 0, kind: input, shape index: {}]
  %s1 = inlined_call_operand.vmem [shape: f32[64,32], index: 1, kind: input, shape index: {}]
  %s2 = inlined_call_operand.vmem [shape: f32[64,1], index: 2, kind: input, shape index: {}]
  %s3 = inlined_call_operand.vmem [shape: f32[64,1], index: 3, kind: input, shape index: {}]
  %s4 = inlined_call_operand.<no memory space> [shape: f32[1,1], index: 4, kind: input, shape index: {}]
  %s5 = inlined_call_operand.hbm [shape: f32[1,8], index: 5, kind: output, shape index: {}]
  %s6 = sld [smem:[#allocation0]]
  $region30: #{tpu_custom_call.1} parent=0
    _
  %s8 = ssub.s32 1, %s6
  %s9 = scalar_select 0, %s8, %s6
  %v10 = vstv %s4
  %11 = vst [vmem:[#allocation2] sm:$0x1] %v10
  $region1: #{tpu_custom_call.1} parent=0
    #allocation3 [shape = 'u8[512]{0}', space=vmem, size = 0x400, scoped, tag = 'output window, operand 0, single buffered']
    #allocation4 [shape = 's32[1]{0}', space=sflag, size = 0x4, scoped, tag = 'scoped memory for tpu_custom_call.1']
    %12 = vsyncpa [#allocation4], 0
    // Predicated region
    $region2: #{tpu_custom_call.1} parent=1 // pred_check
      _
    $region3: #{tpu_custom_call.1} parent=1 // pred_check_branch
      %14 = sbr.rel (0) target = $region5
    $region4: #{tpu_custom_call.1} parent=1 // pred_region
      _
    $region5: #{tpu_custom_call.1} parent=1 // pred_fallthru
      _
    // Predicated region
    $region6: #{tpu_custom_call.1} parent=1 // pred_check
      _
    $region7: #{tpu_custom_call.1} parent=1 // pred_check_branch
      %16 = sbr.rel (0) target = $region9
    $region8: #{tpu_custom_call.1} parent=1 // pred_region
      _
    $region9: #{tpu_custom_call.1} parent=1 // pred_fallthru
      _
    // Predicated region
    $region10: #{tpu_custom_call.1} parent=1 // pred_check
      _
    $region11: #{tpu_custom_call.1} parent=1 // pred_check_branch
      %18 = sbr.rel (0) target = $region13
    $region12: #{tpu_custom_call.1} parent=1 // pred_region
      _
    $region13: #{tpu_custom_call.1} parent=1 // pred_fallthru
      _
    // Predicated region
    $region14: #{tpu_custom_call.1} parent=1 // pred_check
      _
    $region15: #{tpu_custom_call.1} parent=1 // pred_check_branch
      %20 = sbr.rel (0) target = $region17
    $region16: #{tpu_custom_call.1} parent=1 // pred_region
      _
    $region17: #{tpu_custom_call.1} parent=1 // pred_fallthru
      _
    // Predicated region
    $region18: #{tpu_custom_call.1} parent=1 // pred_check
      _
    $region19: #{tpu_custom_call.1} parent=1 // pred_check_branch
      %22 = sbr.rel (0) target = $region21
    $region20: #{tpu_custom_call.1} parent=1 // pred_region
      _
    $region21: #{tpu_custom_call.1} parent=1 // pred_fallthru
      _
    %v23 = vld [vmem:[%s1] sm:$0xff]
    %v24 = vld [vmem:[%s1 + $0x8] sm:$0xff]
    %v25 = vld [vmem:[%s1 + $0x10] sm:$0xff]
    %v26 = vld [vmem:[%s1 + $0x18] sm:$0xff]
    %v27 = vld [vmem:[%s1 + $0x20] sm:$0xff]
    %v28 = vld [vmem:[%s1 + $0x28] sm:$0xff]
    %v29 = vld [vmem:[%s1 + $0x30] sm:$0xff]
    %v30 = vld [vmem:[%s1 + $0x38] sm:$0xff]
    %v31 = vld [vmem:[%s0] sm:$0xff]
    %v32 = vld [vmem:[%s2] sm:$0xff]
    %v33 = vld [vmem:[%s2 + $0x8] sm:$0xff]
    %v34 = vld [vmem:[%s2 + $0x10] sm:$0xff]
    %v35 = vld [vmem:[%s2 + $0x18] sm:$0xff]
    %v36 = vld [vmem:[%s2 + $0x20] sm:$0xff]
    %v37 = vld [vmem:[%s2 + $0x28] sm:$0xff]
    %v38 = vld [vmem:[%s2 + $0x30] sm:$0xff]
    %v39 = vld [vmem:[%s2 + $0x38] sm:$0xff]
    %41 = vset.pattern.permute.xlu0 0
    %42 = vperm.xlu0 %41, %v32
    %v43 = vpop.permute.xlu0 %42
    %46 = vset.pattern.permute.xlu0 0
    %47 = vperm.xlu0 %46, %v33
    %v48 = vpop.permute.xlu0 %47
    %51 = vset.pattern.permute.xlu0 0
    %52 = vperm.xlu0 %51, %v34
    %v53 = vpop.permute.xlu0 %52
    %56 = vset.pattern.permute.xlu0 0
    %57 = vperm.xlu0 %56, %v35
    %v58 = vpop.permute.xlu0 %57
    %61 = vset.pattern.permute.xlu0 0
    %62 = vperm.xlu0 %61, %v36
    %v63 = vpop.permute.xlu0 %62
    %66 = vset.pattern.permute.xlu0 0
    %67 = vperm.xlu0 %66, %v37
    %v68 = vpop.permute.xlu0 %67
    %71 = vset.pattern.permute.xlu0 0
    %72 = vperm.xlu0 %71, %v38
    %v73 = vpop.permute.xlu0 %72
    %76 = vset.pattern.permute.xlu0 0
    %77 = vperm.xlu0 %76, %v39
    %v78 = vpop.permute.xlu0 %77
    %vm80 = vcmask 261120
    %v82 = vsel %vm80, %v23, 0
    %v85 = vsel %vm80, %v24, 0
    %v88 = vsel %vm80, %v25, 0
    %v91 = vsel %vm80, %v26, 0
    %v94 = vsel %vm80, %v27, 0
    %v97 = vsel %vm80, %v28, 0
    %v100 = vsel %vm80, %v29, 0
    %v103 = vsel %vm80, %v30, 0
    %v106 = vsel %vm80, %v31, 0
    %108 = vmatprep.subr.mxu0 0.0
    %109 = vmatpush1.xpose.msra.mxu0 %v106
    %110 = vmatprep.subr.mxu0 0.0
    %111 = vmatpush1.xpose.msra.mxu0 0.0
    %112 = vmatprep.subr.mxu0 0.0
    %113 = vmatpush1.xpose.msra.mxu0 0.0
    %114 = vmatprep.subr.mxu0 0.0
    %115 = vmatpush1.xpose.msra.mxu0 0.0
    %116 = vmatprep.subr.mxu0 0.0
    %117 = vmatpush1.xpose.msra.mxu0 0.0
    %118 = vmatprep.subr.mxu0 0.0
    %119 = vmatpush1.xpose.msra.mxu0 0.0
    %120 = vmatprep.subr.mxu0 0.0
    %121 = vmatpush1.xpose.msra.mxu0 0.0
    %122 = vmatprep.subr.mxu0 0.0
    %123 = vmatpush1.xpose.msra.mxu0 0.0
    %124 = vmatprep.subr.mxu0 0.0
    %125 = vmatpush1.xpose.msra.mxu0 0.0
    %126 = vmatprep.subr.mxu0 0.0
    %127 = vmatpush1.xpose.msra.mxu0 0.0
    %128 = vmatprep.subr.mxu0 0.0
    %129 = vmatpush1.xpose.msra.mxu0 0.0
    %130 = vmatprep.subr.mxu0 0.0
    %131 = vmatpush1.xpose.msra.mxu0 0.0
    %132 = vmatprep.subr.mxu0 0.0
    %133 = vmatpush1.xpose.msra.mxu0 0.0
    %134 = vmatprep.subr.mxu0 0.0
    %135 = vmatpush1.xpose.msra.mxu0 0.0
    %136 = vmatprep.subr.mxu0 0.0
    %137 = vmatpush1.xpose.msra.mxu0 0.0
    %138 = vmatprep.subr.mxu0 0.0
    %139 = vmatpush1.xpose.msra.mxu0 0.0
    %140 = vmatprep.subr.mxu0 0.0
    %141 = vmatpush1.xpose.msra.mxu0 0.0
    %142 = vmatprep.subr.mxu0 0.0
    %143 = vmatpush1.xpose.msra.mxu0 0.0
    %144 = vmatprep.subr.mxu0 0.0
    %145 = vmatpush1.xpose.msra.mxu0 0.0
    %146 = vmatprep.subr.mxu0 0.0
    %147 = vmatpush1.xpose.msra.mxu0 0.0
    %148 = vmatprep.subr.mxu0 0.0
    %149 = vmatpush1.xpose.msra.mxu0 0.0
    %150 = vmatprep.subr.mxu0 0.0
    %151 = vmatpush1.xpose.msra.mxu0 0.0
    %152 = vmatprep.subr.mxu0 0.0
    %153 = vmatpush1.xpose.msra.mxu0 0.0
    %154 = vmatprep.subr.mxu0 0.0
    %155 = vmatpush1.xpose.msra.mxu0 0.0
    %156 = vmatprep.subr.mxu0 0.0
    %157 = vmatpush1.xpose.msra.mxu0 0.0
    %158 = vmatprep.subr.mxu0 0.0
    %159 = vmatpush1.xpose.msra.mxu0 0.0
    %160 = vmatprep.subr.mxu0 0.0
    %161 = vmatpush1.xpose.msra.mxu0 0.0
    %162 = vmatprep.subr.mxu0 0.0
    %163 = vmatpush1.xpose.msra.mxu0 0.0
    %164 = vmatprep.subr.mxu0 0.0
    %165 = vmatpush1.xpose.msra.mxu0 0.0
    %166 = vmatprep.subr.mxu0 0.0
    %167 = vmatpush1.xpose.msra.mxu0 0.0
    %168 = vmatprep.subr.mxu0 0.0
    %169 = vmatpush1.xpose.msra.mxu0 0.0
    %170 = vmatprep.subr.mxu0 0.0
    %171 = vmatpush1.xpose.msra.mxu0 0.0
    %172 = vmatprep.mubr.f32.mxu0 0.0
    %173 = vmatmul.mubr.f32.gmra.mrb[0].mxu0 %v82
    %v174 = vpop.f32.mrb[0].mxu0
    %v175 = vadd.f32 %v43, %v174
    %v176 = vpop.f32.mrb[0].mxu0
    %177 = vmatprep.mubr.f32.mxu0 0.0
    %178 = vmatmul.mubr.f32.gmra.mrb[0].mxu0 %v85
    %v179 = vpop.f32.mrb[0].mxu0
    %v180 = vadd.f32 %v48, %v179
    %v181 = vpop.f32.mrb[0].mxu0
    %182 = vmatprep.mubr.f32.mxu0 0.0
    %183 = vmatmul.mubr.f32.gmra.mrb[0].mxu0 %v88
    %v184 = vpop.f32.mrb[0].mxu0
    %v185 = vadd.f32 %v53, %v184
    %v186 = vpop.f32.mrb[0].mxu0
    %187 = vmatprep.mubr.f32.mxu0 0.0
    %188 = vmatmul.mubr.f32.gmra.mrb[0].mxu0 %v91
    %v189 = vpop.f32.mrb[0].mxu0
    %v190 = vadd.f32 %v58, %v189
    %v191 = vpop.f32.mrb[0].mxu0
    %192 = vmatprep.mubr.f32.mxu0 0.0
    %193 = vmatmul.mubr.f32.gmra.mrb[0].mxu0 %v94
    %v194 = vpop.f32.mrb[0].mxu0
    %v195 = vadd.f32 %v63, %v194
    %v196 = vpop.f32.mrb[0].mxu0
    %197 = vmatprep.mubr.f32.mxu0 0.0
    %198 = vmatmul.mubr.f32.gmra.mrb[0].mxu0 %v97
    %v199 = vpop.f32.mrb[0].mxu0
    %v200 = vadd.f32 %v68, %v199
    %v201 = vpop.f32.mrb[0].mxu0
    %202 = vmatprep.mubr.f32.mxu0 0.0
    %203 = vmatmul.mubr.f32.gmra.mrb[0].mxu0 %v100
    %v204 = vpop.f32.mrb[0].mxu0
    %v205 = vadd.f32 %v73, %v204
    %v206 = vpop.f32.mrb[0].mxu0
    %207 = vmatprep.mubr.f32.mxu0 0.0
    %208 = vmatmul.mubr.f32.gmra.mrb[0].mxu0 %v103
    %v209 = vpop.f32.mrb[0].mxu0
    %v210 = vadd.f32 %v78, %v209
    %v211 = vpop.f32.mrb[0].mxu0
    %212 = vdwg.mxu0
    %v213 = vmax.f32 %v175, 0.0
    %v214 = vmax.f32 %v180, 0.0
    %v215 = vmax.f32 %v185, 0.0
    %v216 = vmax.f32 %v190, 0.0
    %v217 = vmax.f32 %v195, 0.0
    %v218 = vmax.f32 %v200, 0.0
    %v219 = vmax.f32 %v205, 0.0
    %v220 = vmax.f32 %v210, 0.0
    %v221 = vld [vmem:[%s3] sm:$0xff]
    %v222 = vld [vmem:[%s3 + $0x8] sm:$0xff]
    %v223 = vld [vmem:[%s3 + $0x10] sm:$0xff]
    %v224 = vld [vmem:[%s3 + $0x18] sm:$0xff]
    %v225 = vld [vmem:[%s3 + $0x20] sm:$0xff]
    %v226 = vld [vmem:[%s3 + $0x28] sm:$0xff]
    %v227 = vld [vmem:[%s3 + $0x30] sm:$0xff]
    %v228 = vld [vmem:[%s3 + $0x38] sm:$0xff]
    %230 = vset.pattern.permute.xlu0 0
    %231 = vperm.xlu0 %230, %v221
    %v232 = vpop.permute.xlu0 %231
    %235 = vset.pattern.permute.xlu0 0
    %236 = vperm.xlu0 %235, %v222
    %v237 = vpop.permute.xlu0 %236
    %240 = vset.pattern.permute.xlu0 0
    %241 = vperm.xlu0 %240, %v223
    %v242 = vpop.permute.xlu0 %241
    %245 = vset.pattern.permute.xlu0 0
    %246 = vperm.xlu0 %245, %v224
    %v247 = vpop.permute.xlu0 %246
    %250 = vset.pattern.permute.xlu0 0
    %251 = vperm.xlu0 %250, %v225
    %v252 = vpop.permute.xlu0 %251
    %255 = vset.pattern.permute.xlu0 0
    %256 = vperm.xlu0 %255, %v226
    %v257 = vpop.permute.xlu0 %256
    %260 = vset.pattern.permute.xlu0 0
    %261 = vperm.xlu0 %260, %v227
    %v262 = vpop.permute.xlu0 %261
    %265 = vset.pattern.permute.xlu0 0
    %266 = vperm.xlu0 %265, %v228
    %v267 = vpop.permute.xlu0 %266
    %v269 = vmul.f32 %v213, %v232
    %v270 = vmul.f32 %v214, %v237
    %v271 = vmul.f32 %v215, %v242
    %v272 = vmul.f32 %v216, %v247
    %v273 = vmul.f32 %v217, %v252
    %v274 = vmul.f32 %v218, %v257
    %v275 = vmul.f32 %v219, %v262
    %v276 = vmul.f32 %v220, %v267
    %vm277 = vcmask 64512
    %v278 = vsel %vm277, %v269, 0.0
    %v279 = vsel %vm277, %v270, 0.0
    %v280 = vadd.f32 %v278, %v279
    %v281 = vsel %vm277, %v271, 0.0
    %v282 = vadd.f32 %v280, %v281
    %v283 = vsel %vm277, %v272, 0.0
    %v284 = vadd.f32 %v282, %v283
    %v285 = vsel %vm277, %v273, 0.0
    %v286 = vadd.f32 %v284, %v285
    %v287 = vsel %vm277, %v274, 0.0
    %v288 = vadd.f32 %v286, %v287
    %v289 = vsel %vm277, %v275, 0.0
    %v290 = vadd.f32 %v288, %v289
    %v291 = vsel %vm277, %v276, 0.0
    %v292 = vadd.f32 %v290, %v291
    %v293 = vrot.slane %v292, 4
    %v294 = vadd.f32 %v292, %v293
    %v295 = vrot.slane %v294, 2
    %v296 = vadd.f32 %v294, %v295
    %v297 = vrot.slane %v296, 1
    %v298 = vadd.f32 %v296, %v297
    %v299 = vld [vmem:[#allocation2] sm:$0x1]
    %301 = vset.pattern.permute.xlu0 0
    %302 = vperm.xlu0 %301, %v299
    %v303 = vpop.permute.xlu0 %302
    %v305 = vlaneseq
    %v306 = vshrl.u32 %v305, 7
    %v307 = vsub.s32 0, %v306
    %v308 = vrot.slane %v303, %v307
    %v309 = vadd.f32 %v298, %v308
    %vm310 = vcmask 57344
    %311 = vst.msk [vmem:[#allocation3] sm:$0x1] %vm310, %v309
    // Predicated region
    $region22: #{tpu_custom_call.1} parent=1 // pred_check
      _
    $region23: #{tpu_custom_call.1} parent=1 // pred_check_branch
      %313 = sbr.rel (0) target = $region25
    $region24: #{tpu_custom_call.1} parent=1 // pred_region
      %s315 = ssub.s32 16, 16
      %316 = vsyncadd [#allocation4], %s315
      %s318 = sshll.u32 [#allocation3], 4
      %s319 = int_to_ptr.vmem [resolvable:$true] %s318
      %321 = dma.vmem_to_hbm [thread:$0]  %s319, 16, %s5, [#allocation4]
    $region25: #{tpu_custom_call.1} parent=1 // pred_fallthru
      _
    // Predicated region
    $region26: #{tpu_custom_call.1} parent=1 // pred_check
      _
    $region27: #{tpu_custom_call.1} parent=1 // pred_check_branch
      %323 = sbr.rel (0) target = $region29
    $region28: #{tpu_custom_call.1} parent=1 // pred_region
      %324 = dma.done [#allocation4], 16
    $region29: #{tpu_custom_call.1} parent=1 // pred_fallthru
      _
    %325 = vsyncpa [#allocation4], 1

</llo_original>
